<compile_context>
chip_gen: v6e
topology: v6e:2x2x1
jax: 0.10.0
libtpu: 0.0.40
codegen_flags: <defaults>
</compile_context>

<pallas_src>
import jax
import jax.numpy as jnp
from jax.experimental import pallas as pl
from jax.experimental.pallas import tpu as pltpu


def embedding_gather_kernel(ids_ref, table_hbm, out_ref, copy_sems):
    # ids_ref:   (n_tok_padded,) int32 in SMEM (scalar prefetch)
    # table_hbm: (V, E) table left in HBM (pl.ANY) -- we DMA rows manually
    # out_ref:   (token_tile, E) VMEM output block for this grid step
    # copy_sems: (token_tile,) DMA semaphores
    tile = pl.program_id(0)
    token_tile = out_ref.shape[0]
    base = tile * token_tile

    # Issue all row-gather DMAs for this tile (HBM table row -> VMEM out row).
    copies = []
    for t in range(token_tile):          # static unroll; keep token_tile modest
        tok = ids_ref[base + t]          # scalar read from SMEM
        cp = pltpu.make_async_copy(
            table_hbm.at[tok],           # (E,) row in HBM, data-dependent index
            out_ref.at[t],               # (E,) row of the output block
            copy_sems.at[t],
        )
        cp.start()
        copies.append(cp)

    # All rows must land in the output block before the body returns (the
    # pipeline writes this block back to HBM afterwards).
    for cp in copies:
        cp.wait()


def bpe_token_embedding(input_ids, table, *, token_tile=8):
    """Equivalent of torch.nn.Embedding(vocab, emb)(input_ids) -> (B, S, E)."""
    B, S = input_ids.shape
    V, E = table.shape
    n_tok = B * S

    assert token_tile % 8 == 0, "token_tile must be a multiple of 8 (f32 sublane)"

    ids_flat = input_ids.reshape(n_tok).astype(jnp.int32)
    # torch.nn.Embedding raises on out-of-range ids; we clamp to stay safe for
    # the data-dependent DMA.  For in-range ids the result is identical.
    ids_flat = jnp.clip(ids_flat, 0, V - 1)

    # Pad token count up to a multiple of token_tile (extra tokens gather row 0
    # and are sliced off afterwards).
    pad = (-n_tok) % token_tile
    if pad:
        ids_flat = jnp.concatenate(
            [ids_flat, jnp.zeros((pad,), dtype=jnp.int32)]
        )
    n_pad = n_tok + pad

    out_flat = pl.pallas_call(
        embedding_gather_kernel,
        out_shape=jax.ShapeDtypeStruct((n_pad, E), table.dtype),
        grid_spec=pltpu.PrefetchScalarGridSpec(
            num_scalar_prefetch=1,                       # ids -> SMEM
            grid=(n_pad // token_tile,),
            in_specs=[
                pl.BlockSpec(memory_space=pl.ANY),       # table stays in HBM
            ],
            out_specs=pl.BlockSpec(
                (token_tile, E), lambda i, ids: (i, 0)
            ),
            scratch_shapes=[
                pltpu.SemaphoreType.DMA((token_tile,)),
            ],
        ),
        compiler_params=pltpu.CompilerParams(
            dimension_semantics=("parallel",),           # tiles are independent
        ),
    )(ids_flat, table)

    return out_flat[:n_tok].reshape(B, S, E)


if __name__ == "__main__":
    vocab_size = 256
    embedding_dim = 128
    B, S = 2, 8

    key = jax.random.PRNGKey(0)
    k_table, k_ids = jax.random.split(key)

    # Deterministic "nn.Embedding" weight init (PyTorch default is N(0, 1)).
    table = jax.random.normal(
        k_table, (vocab_size, embedding_dim), dtype=jnp.float32
    )
    input_ids = jax.random.randint(
        k_ids, (B, S), 0, vocab_size, dtype=jnp.int32
    )

    out = bpe_token_embedding(input_ids, table)
    out = jax.block_until_ready(out)

    # Reference: plain gather in JAX (exact -- the kernel moves rows verbatim).
    ref = table[input_ids]
    assert out.shape == (B, S, embedding_dim)
    assert jnp.allclose(out, ref, atol=0.0), "mismatch vs. reference gather"

    print("KERNEL_OK")
</pallas_src>

<mosaic_0001>
module attributes {stable_mosaic.version = 11 : i64} {
  func.func @embedding_gather_kernel(%arg0: i32, %arg1: memref<16xi32, #tpu.memory_space<smem>>, %arg2: memref<256x128xf32, #tpu.memory_space<any>>, %arg3: memref<8x128xf32, #tpu.memory_space<vmem>>, %arg4: memref<8x!tpu.dma_semaphore, #tpu.memory_space<semaphore_mem>>) attributes {dimension_semantics = [#tpu.dimension_semantics<parallel>], iteration_bounds = array<i64: 2>, scalar_prefetch = 1 : i64, scratch_operands = 1 : i64, tpu.core_type = #tpu.core_type<tc>, window_params = [{}, {transform_indices = @transform_1, window_bounds = array<i64: 8, 128>}]} {
    %c8_i32 = arith.constant 8 : i32
    %0 = arith.muli %arg0, %c8_i32 : i32
    %c0_i32 = arith.constant 0 : i32
    %1 = arith.addi %0, %c0_i32 : i32
    %2 = arith.index_cast %1 : i32 to index
    %3 = memref.load %arg1[%2] : memref<16xi32, #tpu.memory_space<smem>>
    %c0_i32_0 = arith.constant 0 : i32
    %c0_i32_1 = arith.constant 0 : i32
    %c0_i32_2 = arith.constant 0 : i32
    %4 = tpu.memref_slice %arg2[%3, %c0_i32_2] : memref<256x128xf32, #tpu.memory_space<any>> -> memref<1x128xf32, #tpu.memory_space<any>>
    %5 = tpu.memref_squeeze %4 : memref<1x128xf32, #tpu.memory_space<any>> -> memref<128xf32, #tpu.memory_space<any>>
    %c0_i32_3 = arith.constant 0 : i32
    %6 = tpu.memref_slice %arg3[%c0_i32_0, %c0_i32_3] : memref<8x128xf32, #tpu.memory_space<vmem>> -> memref<1x128xf32, #tpu.memory_space<vmem>>
    %7 = tpu.memref_squeeze %6 : memref<1x128xf32, #tpu.memory_space<vmem>> -> memref<128xf32, #tpu.memory_space<vmem>>
    %8 = tpu.memref_slice %arg4[%c0_i32_1] : memref<8x!tpu.dma_semaphore, #tpu.memory_space<semaphore_mem>> -> memref<1x!tpu.dma_semaphore, #tpu.memory_space<semaphore_mem>>
    %9 = tpu.memref_squeeze %8 : memref<1x!tpu.dma_semaphore, #tpu.memory_space<semaphore_mem>> -> memref<!tpu.dma_semaphore, #tpu.memory_space<semaphore_mem>>
    tpu.enqueue_dma source(%5 : memref<128xf32, #tpu.memory_space<any>>) target(%7 : memref<128xf32, #tpu.memory_space<vmem>>) target_semaphore(%9 : memref<!tpu.dma_semaphore, #tpu.memory_space<semaphore_mem>>)
    %c1_i32 = arith.constant 1 : i32
    %10 = arith.addi %0, %c1_i32 : i32
    %11 = arith.index_cast %10 : i32 to index
    %12 = memref.load %arg1[%11] : memref<16xi32, #tpu.memory_space<smem>>
    %c1_i32_4 = arith.constant 1 : i32
    %c1_i32_5 = arith.constant 1 : i32
    %c0_i32_6 = arith.constant 0 : i32
    %13 = tpu.memref_slice %arg2[%12, %c0_i32_6] : memref<256x128xf32, #tpu.memory_space<any>> -> memref<1x128xf32, #tpu.memory_space<any>>
    %14 = tpu.memref_squeeze %13 : memref<1x128xf32, #tpu.memory_space<any>> -> memref<128xf32, #tpu.memory_space<any>>
    %c0_i32_7 = arith.constant 0 : i32
    %15 = tpu.memref_slice %arg3[%c1_i32_4, %c0_i32_7] : memref<8x128xf32, #tpu.memory_space<vmem>> -> memref<1x128xf32, #tpu.memory_space<vmem>>
    %16 = tpu.memref_squeeze %15 : memref<1x128xf32, #tpu.memory_space<vmem>> -> memref<128xf32, #tpu.memory_space<vmem>>
    %17 = tpu.memref_slice %arg4[%c1_i32_5] : memref<8x!tpu.dma_semaphore, #tpu.memory_space<semaphore_mem>> -> memref<1x!tpu.dma_semaphore, #tpu.memory_space<semaphore_mem>>
    %18 = tpu.memref_squeeze %17 : memref<1x!tpu.dma_semaphore, #tpu.memory_space<semaphore_mem>> -> memref<!tpu.dma_semaphore, #tpu.memory_space<semaphore_mem>>
    tpu.enqueue_dma source(%14 : memref<128xf32, #tpu.memory_space<any>>) target(%16 : memref<128xf32, #tpu.memory_space<vmem>>) target_semaphore(%18 : memref<!tpu.dma_semaphore, #tpu.memory_space<semaphore_mem>>)
    %c2_i32 = arith.constant 2 : i32
    %19 = arith.addi %0, %c2_i32 : i32
    %20 = arith.index_cast %19 : i32 to index
    %21 = memref.load %arg1[%20] : memref<16xi32, #tpu.memory_space<smem>>
    %c2_i32_8 = arith.constant 2 : i32
    %c2_i32_9 = arith.constant 2 : i32
    %c0_i32_10 = arith.constant 0 : i32
    %22 = tpu.memref_slice %arg2[%21, %c0_i32_10] : memref<256x128xf32, #tpu.memory_space<any>> -> memref<1x128xf32, #tpu.memory_space<any>>
    %23 = tpu.memref_squeeze %22 : memref<1x128xf32, #tpu.memory_space<any>> -> memref<128xf32, #tpu.memory_space<any>>
    %c0_i32_11 = arith.constant 0 : i32
    %24 = tpu.memref_slice %arg3[%c2_i32_8, %c0_i32_11] : memref<8x128xf32, #tpu.memory_space<vmem>> -> memref<1x128xf32, #tpu.memory_space<vmem>>
    %25 = tpu.memref_squeeze %24 : memref<1x128xf32, #tpu.memory_space<vmem>> -> memref<128xf32, #tpu.memory_space<vmem>>
    %26 = tpu.memref_slice %arg4[%c2_i32_9] : memref<8x!tpu.dma_semaphore, #tpu.memory_space<semaphore_mem>> -> memref<1x!tpu.dma_semaphore, #tpu.memory_space<semaphore_mem>>
    %27 = tpu.memref_squeeze %26 : memref<1x!tpu.dma_semaphore, #tpu.memory_space<semaphore_mem>> -> memref<!tpu.dma_semaphore, #tpu.memory_space<semaphore_mem>>
    tpu.enqueue_dma source(%23 : memref<128xf32, #tpu.memory_space<any>>) target(%25 : memref<128xf32, #tpu.memory_space<vmem>>) target_semaphore(%27 : memref<!tpu.dma_semaphore, #tpu.memory_space<semaphore_mem>>)
    %c3_i32 = arith.constant 3 : i32
    %28 = arith.addi %0, %c3_i32 : i32
    %29 = arith.index_cast %28 : i32 to index
    %30 = memref.load %arg1[%29] : memref<16xi32, #tpu.memory_space<smem>>
    %c3_i32_12 = arith.constant 3 : i32
    %c3_i32_13 = arith.constant 3 : i32
    %c0_i32_14 = arith.constant 0 : i32
    %31 = tpu.memref_slice %arg2[%30, %c0_i32_14] : memref<256x128xf32, #tpu.memory_space<any>> -> memref<1x128xf32, #tpu.memory_space<any>>
    %32 = tpu.memref_squeeze %31 : memref<1x128xf32, #tpu.memory_space<any>> -> memref<128xf32, #tpu.memory_space<any>>
    %c0_i32_15 = arith.constant 0 : i32
    %33 = tpu.memref_slice %arg3[%c3_i32_12, %c0_i32_15] : memref<8x128xf32, #tpu.memory_space<vmem>> -> memref<1x128xf32, #tpu.memory_space<vmem>>
    %34 = tpu.memref_squeeze %33 : memref<1x128xf32, #tpu.memory_space<vmem>> -> memref<128xf32, #tpu.memory_space<vmem>>
    %35 = tpu.memref_slice %arg4[%c3_i32_13] : memref<8x!tpu.dma_semaphore, #tpu.memory_space<semaphore_mem>> -> memref<1x!tpu.dma_semaphore, #tpu.memory_space<semaphore_mem>>
    %36 = tpu.memref_squeeze %35 : memref<1x!tpu.dma_semaphore, #tpu.memory_space<semaphore_mem>> -> memref<!tpu.dma_semaphore, #tpu.memory_space<semaphore_mem>>
    tpu.enqueue_dma source(%32 : memref<128xf32, #tpu.memory_space<any>>) target(%34 : memref<128xf32, #tpu.memory_space<vmem>>) target_semaphore(%36 : memref<!tpu.dma_semaphore, #tpu.memory_space<semaphore_mem>>)
    %c4_i32 = arith.constant 4 : i32
    %37 = arith.addi %0, %c4_i32 : i32
    %38 = arith.index_cast %37 : i32 to index
    %39 = memref.load %arg1[%38] : memref<16xi32, #tpu.memory_space<smem>>
    %c4_i32_16 = arith.constant 4 : i32
    %c4_i32_17 = arith.constant 4 : i32
    %c0_i32_18 = arith.constant 0 : i32
    %40 = tpu.memref_slice %arg2[%39, %c0_i32_18] : memref<256x128xf32, #tpu.memory_space<any>> -> memref<1x128xf32, #tpu.memory_space<any>>
    %41 = tpu.memref_squeeze %40 : memref<1x128xf32, #tpu.memory_space<any>> -> memref<128xf32, #tpu.memory_space<any>>
    %c0_i32_19 = arith.constant 0 : i32
    %42 = tpu.memref_slice %arg3[%c4_i32_16, %c0_i32_19] : memref<8x128xf32, #tpu.memory_space<vmem>> -> memref<1x128xf32, #tpu.memory_space<vmem>>
    %43 = tpu.memref_squeeze %42 : memref<1x128xf32, #tpu.memory_space<vmem>> -> memref<128xf32, #tpu.memory_space<vmem>>
    %44 = tpu.memref_slice %arg4[%c4_i32_17] : memref<8x!tpu.dma_semaphore, #tpu.memory_space<semaphore_mem>> -> memref<1x!tpu.dma_semaphore, #tpu.memory_space<semaphore_mem>>
    %45 = tpu.memref_squeeze %44 : memref<1x!tpu.dma_semaphore, #tpu.memory_space<semaphore_mem>> -> memref<!tpu.dma_semaphore, #tpu.memory_space<semaphore_mem>>
    tpu.enqueue_dma source(%41 : memref<128xf32, #tpu.memory_space<any>>) target(%43 : memref<128xf32, #tpu.memory_space<vmem>>) target_semaphore(%45 : memref<!tpu.dma_semaphore, #tpu.memory_space<semaphore_mem>>)
    %c5_i32 = arith.constant 5 : i32
    %46 = arith.addi %0, %c5_i32 : i32
    %47 = arith.index_cast %46 : i32 to index
    %48 = memref.load %arg1[%47] : memref<16xi32, #tpu.memory_space<smem>>
    %c5_i32_20 = arith.constant 5 : i32
    %c5_i32_21 = arith.constant 5 : i32
    %c0_i32_22 = arith.constant 0 : i32
    %49 = tpu.memref_slice %arg2[%48, %c0_i32_22] : memref<256x128xf32, #tpu.memory_space<any>> -> memref<1x128xf32, #tpu.memory_space<any>>
    %50 = tpu.memref_squeeze %49 : memref<1x128xf32, #tpu.memory_space<any>> -> memref<128xf32, #tpu.memory_space<any>>
    %c0_i32_23 = arith.constant 0 : i32
    %51 = tpu.memref_slice %arg3[%c5_i32_20, %c0_i32_23] : memref<8x128xf32, #tpu.memory_space<vmem>> -> memref<1x128xf32, #tpu.memory_space<vmem>>
    %52 = tpu.memref_squeeze %51 : memref<1x128xf32, #tpu.memory_space<vmem>> -> memref<128xf32, #tpu.memory_space<vmem>>
    %53 = tpu.memref_slice %arg4[%c5_i32_21] : memref<8x!tpu.dma_semaphore, #tpu.memory_space<semaphore_mem>> -> memref<1x!tpu.dma_semaphore, #tpu.memory_space<semaphore_mem>>
    %54 = tpu.memref_squeeze %53 : memref<1x!tpu.dma_semaphore, #tpu.memory_space<semaphore_mem>> -> memref<!tpu.dma_semaphore, #tpu.memory_space<semaphore_mem>>
    tpu.enqueue_dma source(%50 : memref<128xf32, #tpu.memory_space<any>>) target(%52 : memref<128xf32, #tpu.memory_space<vmem>>) target_semaphore(%54 : memref<!tpu.dma_semaphore, #tpu.memory_space<semaphore_mem>>)
    %c6_i32 = arith.constant 6 : i32
    %55 = arith.addi %0, %c6_i32 : i32
    %56 = arith.index_cast %55 : i32 to index
    %57 = memref.load %arg1[%56] : memref<16xi32, #tpu.memory_space<smem>>
    %c6_i32_24 = arith.constant 6 : i32
    %c6_i32_25 = arith.constant 6 : i32
    %c0_i32_26 = arith.constant 0 : i32
    %58 = tpu.memref_slice %arg2[%57, %c0_i32_26] : memref<256x128xf32, #tpu.memory_space<any>> -> memref<1x128xf32, #tpu.memory_space<any>>
    %59 = tpu.memref_squeeze %58 : memref<1x128xf32, #tpu.memory_space<any>> -> memref<128xf32, #tpu.memory_space<any>>
    %c0_i32_27 = arith.constant 0 : i32
    %60 = tpu.memref_slice %arg3[%c6_i32_24, %c0_i32_27] : memref<8x128xf32, #tpu.memory_space<vmem>> -> memref<1x128xf32, #tpu.memory_space<vmem>>
    %61 = tpu.memref_squeeze %60 : memref<1x128xf32, #tpu.memory_space<vmem>> -> memref<128xf32, #tpu.memory_space<vmem>>
    %62 = tpu.memref_slice %arg4[%c6_i32_25] : memref<8x!tpu.dma_semaphore, #tpu.memory_space<semaphore_mem>> -> memref<1x!tpu.dma_semaphore, #tpu.memory_space<semaphore_mem>>
    %63 = tpu.memref_squeeze %62 : memref<1x!tpu.dma_semaphore, #tpu.memory_space<semaphore_mem>> -> memref<!tpu.dma_semaphore, #tpu.memory_space<semaphore_mem>>
    tpu.enqueue_dma source(%59 : memref<128xf32, #tpu.memory_space<any>>) target(%61 : memref<128xf32, #tpu.memory_space<vmem>>) target_semaphore(%63 : memref<!tpu.dma_semaphore, #tpu.memory_space<semaphore_mem>>)
    %c7_i32 = arith.constant 7 : i32
    %64 = arith.addi %0, %c7_i32 : i32
    %65 = arith.index_cast %64 : i32 to index
    %66 = memref.load %arg1[%65] : memref<16xi32, #tpu.memory_space<smem>>
    %c7_i32_28 = arith.constant 7 : i32
    %c7_i32_29 = arith.constant 7 : i32
    %c0_i32_30 = arith.constant 0 : i32
    %67 = tpu.memref_slice %arg2[%66, %c0_i32_30] : memref<256x128xf32, #tpu.memory_space<any>> -> memref<1x128xf32, #tpu.memory_space<any>>
    %68 = tpu.memref_squeeze %67 : memref<1x128xf32, #tpu.memory_space<any>> -> memref<128xf32, #tpu.memory_space<any>>
    %c0_i32_31 = arith.constant 0 : i32
    %69 = tpu.memref_slice %arg3[%c7_i32_28, %c0_i32_31] : memref<8x128xf32, #tpu.memory_space<vmem>> -> memref<1x128xf32, #tpu.memory_space<vmem>>
    %70 = tpu.memref_squeeze %69 : memref<1x128xf32, #tpu.memory_space<vmem>> -> memref<128xf32, #tpu.memory_space<vmem>>
    %71 = tpu.memref_slice %arg4[%c7_i32_29] : memref<8x!tpu.dma_semaphore, #tpu.memory_space<semaphore_mem>> -> memref<1x!tpu.dma_semaphore, #tpu.memory_space<semaphore_mem>>
    %72 = tpu.memref_squeeze %71 : memref<1x!tpu.dma_semaphore, #tpu.memory_space<semaphore_mem>> -> memref<!tpu.dma_semaphore, #tpu.memory_space<semaphore_mem>>
    tpu.enqueue_dma source(%68 : memref<128xf32, #tpu.memory_space<any>>) target(%70 : memref<128xf32, #tpu.memory_space<vmem>>) target_semaphore(%72 : memref<!tpu.dma_semaphore, #tpu.memory_space<semaphore_mem>>)
    %c0_i32_32 = arith.constant 0 : i32
    %c0_i32_33 = arith.constant 0 : i32
    %c0_i32_34 = arith.constant 0 : i32
    %73 = tpu.memref_slice %arg2[%3, %c0_i32_34] : memref<256x128xf32, #tpu.memory_space<any>> -> memref<1x128xf32, #tpu.memory_space<any>>
    %74 = tpu.memref_squeeze %73 : memref<1x128xf32, #tpu.memory_space<any>> -> memref<128xf32, #tpu.memory_space<any>>
    %c0_i32_35 = arith.constant 0 : i32
    %75 = tpu.memref_slice %arg3[%c0_i32_32, %c0_i32_35] : memref<8x128xf32, #tpu.memory_space<vmem>> -> memref<1x128xf32, #tpu.memory_space<vmem>>
    %76 = tpu.memref_squeeze %75 : memref<1x128xf32, #tpu.memory_space<vmem>> -> memref<128xf32, #tpu.memory_space<vmem>>
    %77 = tpu.memref_slice %arg4[%c0_i32_33] : memref<8x!tpu.dma_semaphore, #tpu.memory_space<semaphore_mem>> -> memref<1x!tpu.dma_semaphore, #tpu.memory_space<semaphore_mem>>
    %78 = tpu.memref_squeeze %77 : memref<1x!tpu.dma_semaphore, #tpu.memory_space<semaphore_mem>> -> memref<!tpu.dma_semaphore, #tpu.memory_space<semaphore_mem>>
    tpu.wait_dma2 semaphore(%78 : memref<!tpu.dma_semaphore, #tpu.memory_space<semaphore_mem>>) src(%74 : memref<128xf32, #tpu.memory_space<any>>) dst(%76 : memref<128xf32, #tpu.memory_space<vmem>>)
    %c1_i32_36 = arith.constant 1 : i32
    %c1_i32_37 = arith.constant 1 : i32
    %c0_i32_38 = arith.constant 0 : i32
    %79 = tpu.memref_slice %arg2[%12, %c0_i32_38] : memref<256x128xf32, #tpu.memory_space<any>> -> memref<1x128xf32, #tpu.memory_space<any>>
    %80 = tpu.memref_squeeze %79 : memref<1x128xf32, #tpu.memory_space<any>> -> memref<128xf32, #tpu.memory_space<any>>
    %c0_i32_39 = arith.constant 0 : i32
    %81 = tpu.memref_slice %arg3[%c1_i32_36, %c0_i32_39] : memref<8x128xf32, #tpu.memory_space<vmem>> -> memref<1x128xf32, #tpu.memory_space<vmem>>
    %82 = tpu.memref_squeeze %81 : memref<1x128xf32, #tpu.memory_space<vmem>> -> memref<128xf32, #tpu.memory_space<vmem>>
    %83 = tpu.memref_slice %arg4[%c1_i32_37] : memref<8x!tpu.dma_semaphore, #tpu.memory_space<semaphore_mem>> -> memref<1x!tpu.dma_semaphore, #tpu.memory_space<semaphore_mem>>
    %84 = tpu.memref_squeeze %83 : memref<1x!tpu.dma_semaphore, #tpu.memory_space<semaphore_mem>> -> memref<!tpu.dma_semaphore, #tpu.memory_space<semaphore_mem>>
    tpu.wait_dma2 semaphore(%84 : memref<!tpu.dma_semaphore, #tpu.memory_space<semaphore_mem>>) src(%80 : memref<128xf32, #tpu.memory_space<any>>) dst(%82 : memref<128xf32, #tpu.memory_space<vmem>>)
    %c2_i32_40 = arith.constant 2 : i32
    %c2_i32_41 = arith.constant 2 : i32
    %c0_i32_42 = arith.constant 0 : i32
    %85 = tpu.memref_slice %arg2[%21, %c0_i32_42] : memref<256x128xf32, #tpu.memory_space<any>> -> memref<1x128xf32, #tpu.memory_space<any>>
    %86 = tpu.memref_squeeze %85 : memref<1x128xf32, #tpu.memory_space<any>> -> memref<128xf32, #tpu.memory_space<any>>
    %c0_i32_43 = arith.constant 0 : i32
    %87 = tpu.memref_slice %arg3[%c2_i32_40, %c0_i32_43] : memref<8x128xf32, #tpu.memory_space<vmem>> -> memref<1x128xf32, #tpu.memory_space<vmem>>
    %88 = tpu.memref_squeeze %87 : memref<1x128xf32, #tpu.memory_space<vmem>> -> memref<128xf32, #tpu.memory_space<vmem>>
    %89 = tpu.memref_slice %arg4[%c2_i32_41] : memref<8x!tpu.dma_semaphore, #tpu.memory_space<semaphore_mem>> -> memref<1x!tpu.dma_semaphore, #tpu.memory_space<semaphore_mem>>
    %90 = tpu.memref_squeeze %89 : memref<1x!tpu.dma_semaphore, #tpu.memory_space<semaphore_mem>> -> memref<!tpu.dma_semaphore, #tpu.memory_space<semaphore_mem>>
    tpu.wait_dma2 semaphore(%90 : memref<!tpu.dma_semaphore, #tpu.memory_space<semaphore_mem>>) src(%86 : memref<128xf32, #tpu.memory_space<any>>) dst(%88 : memref<128xf32, #tpu.memory_space<vmem>>)
    %c3_i32_44 = arith.constant 3 : i32
    %c3_i32_45 = arith.constant 3 : i32
    %c0_i32_46 = arith.constant 0 : i32
    %91 = tpu.memref_slice %arg2[%30, %c0_i32_46] : memref<256x128xf32, #tpu.memory_space<any>> -> memref<1x128xf32, #tpu.memory_space<any>>
    %92 = tpu.memref_squeeze %91 : memref<1x128xf32, #tpu.memory_space<any>> -> memref<128xf32, #tpu.memory_space<any>>
    %c0_i32_47 = arith.constant 0 : i32
    %93 = tpu.memref_slice %arg3[%c3_i32_44, %c0_i32_47] : memref<8x128xf32, #tpu.memory_space<vmem>> -> memref<1x128xf32, #tpu.memory_space<vmem>>
    %94 = tpu.memref_squeeze %93 : memref<1x128xf32, #tpu.memory_space<vmem>> -> memref<128xf32, #tpu.memory_space<vmem>>
    %95 = tpu.memref_slice %arg4[%c3_i32_45] : memref<8x!tpu.dma_semaphore, #tpu.memory_space<semaphore_mem>> -> memref<1x!tpu.dma_semaphore, #tpu.memory_space<semaphore_mem>>
    %96 = tpu.memref_squeeze %95 : memref<1x!tpu.dma_semaphore, #tpu.memory_space<semaphore_mem>> -> memref<!tpu.dma_semaphore, #tpu.memory_space<semaphore_mem>>
    tpu.wait_dma2 semaphore(%96 : memref<!tpu.dma_semaphore, #tpu.memory_space<semaphore_mem>>) src(%92 : memref<128xf32, #tpu.memory_space<any>>) dst(%94 : memref<128xf32, #tpu.memory_space<vmem>>)
    %c4_i32_48 = arith.constant 4 : i32
    %c4_i32_49 = arith.constant 4 : i32
    %c0_i32_50 = arith.constant 0 : i32
    %97 = tpu.memref_slice %arg2[%39, %c0_i32_50] : memref<256x128xf32, #tpu.memory_space<any>> -> memref<1x128xf32, #tpu.memory_space<any>>
    %98 = tpu.memref_squeeze %97 : memref<1x128xf32, #tpu.memory_space<any>> -> memref<128xf32, #tpu.memory_space<any>>
    %c0_i32_51 = arith.constant 0 : i32
    %99 = tpu.memref_slice %arg3[%c4_i32_48, %c0_i32_51] : memref<8x128xf32, #tpu.memory_space<vmem>> -> memref<1x128xf32, #tpu.memory_space<vmem>>
    %100 = tpu.memref_squeeze %99 : memref<1x128xf32, #tpu.memory_space<vmem>> -> memref<128xf32, #tpu.memory_space<vmem>>
    %101 = tpu.memref_slice %arg4[%c4_i32_49] : memref<8x!tpu.dma_semaphore, #tpu.memory_space<semaphore_mem>> -> memref<1x!tpu.dma_semaphore, #tpu.memory_space<semaphore_mem>>
    %102 = tpu.memref_squeeze %101 : memref<1x!tpu.dma_semaphore, #tpu.memory_space<semaphore_mem>> -> memref<!tpu.dma_semaphore, #tpu.memory_space<semaphore_mem>>
    tpu.wait_dma2 semaphore(%102 : memref<!tpu.dma_semaphore, #tpu.memory_space<semaphore_mem>>) src(%98 : memref<128xf32, #tpu.memory_space<any>>) dst(%100 : memref<128xf32, #tpu.memory_space<vmem>>)
    %c5_i32_52 = arith.constant 5 : i32
    %c5_i32_53 = arith.constant 5 : i32
    %c0_i32_54 = arith.constant 0 : i32
    %103 = tpu.memref_slice %arg2[%48, %c0_i32_54] : memref<256x128xf32, #tpu.memory_space<any>> -> memref<1x128xf32, #tpu.memory_space<any>>
    %104 = tpu.memref_squeeze %103 : memref<1x128xf32, #tpu.memory_space<any>> -> memref<128xf32, #tpu.memory_space<any>>
    %c0_i32_55 = arith.constant 0 : i32
    %105 = tpu.memref_slice %arg3[%c5_i32_52, %c0_i32_55] : memref<8x128xf32, #tpu.memory_space<vmem>> -> memref<1x128xf32, #tpu.memory_space<vmem>>
    %106 = tpu.memref_squeeze %105 : memref<1x128xf32, #tpu.memory_space<vmem>> -> memref<128xf32, #tpu.memory_space<vmem>>
    %107 = tpu.memref_slice %arg4[%c5_i32_53] : memref<8x!tpu.dma_semaphore, #tpu.memory_space<semaphore_mem>> -> memref<1x!tpu.dma_semaphore, #tpu.memory_space<semaphore_mem>>
    %108 = tpu.memref_squeeze %107 : memref<1x!tpu.dma_semaphore, #tpu.memory_space<semaphore_mem>> -> memref<!tpu.dma_semaphore, #tpu.memory_space<semaphore_mem>>
    tpu.wait_dma2 semaphore(%108 : memref<!tpu.dma_semaphore, #tpu.memory_space<semaphore_mem>>) src(%104 : memref<128xf32, #tpu.memory_space<any>>) dst(%106 : memref<128xf32, #tpu.memory_space<vmem>>)
    %c6_i32_56 = arith.constant 6 : i32
    %c6_i32_57 = arith.constant 6 : i32
    %c0_i32_58 = arith.constant 0 : i32
    %109 = tpu.memref_slice %arg2[%57, %c0_i32_58] : memref<256x128xf32, #tpu.memory_space<any>> -> memref<1x128xf32, #tpu.memory_space<any>>
    %110 = tpu.memref_squeeze %109 : memref<1x128xf32, #tpu.memory_space<any>> -> memref<128xf32, #tpu.memory_space<any>>
    %c0_i32_59 = arith.constant 0 : i32
    %111 = tpu.memref_slice %arg3[%c6_i32_56, %c0_i32_59] : memref<8x128xf32, #tpu.memory_space<vmem>> -> memref<1x128xf32, #tpu.memory_space<vmem>>
    %112 = tpu.memref_squeeze %111 : memref<1x128xf32, #tpu.memory_space<vmem>> -> memref<128xf32, #tpu.memory_space<vmem>>
    %113 = tpu.memref_slice %arg4[%c6_i32_57] : memref<8x!tpu.dma_semaphore, #tpu.memory_space<semaphore_mem>> -> memref<1x!tpu.dma_semaphore, #tpu.memory_space<semaphore_mem>>
    %114 = tpu.memref_squeeze %113 : memref<1x!tpu.dma_semaphore, #tpu.memory_space<semaphore_mem>> -> memref<!tpu.dma_semaphore, #tpu.memory_space<semaphore_mem>>
    tpu.wait_dma2 semaphore(%114 : memref<!tpu.dma_semaphore, #tpu.memory_space<semaphore_mem>>) src(%110 : memref<128xf32, #tpu.memory_space<any>>) dst(%112 : memref<128xf32, #tpu.memory_space<vmem>>)
    %c7_i32_60 = arith.constant 7 : i32
    %c7_i32_61 = arith.constant 7 : i32
    %c0_i32_62 = arith.constant 0 : i32
    %115 = tpu.memref_slice %arg2[%66, %c0_i32_62] : memref<256x128xf32, #tpu.memory_space<any>> -> memref<1x128xf32, #tpu.memory_space<any>>
    %116 = tpu.memref_squeeze %115 : memref<1x128xf32, #tpu.memory_space<any>> -> memref<128xf32, #tpu.memory_space<any>>
    %c0_i32_63 = arith.constant 0 : i32
    %117 = tpu.memref_slice %arg3[%c7_i32_60, %c0_i32_63] : memref<8x128xf32, #tpu.memory_space<vmem>> -> memref<1x128xf32, #tpu.memory_space<vmem>>
    %118 = tpu.memref_squeeze %117 : memref<1x128xf32, #tpu.memory_space<vmem>> -> memref<128xf32, #tpu.memory_space<vmem>>
    %119 = tpu.memref_slice %arg4[%c7_i32_61] : memref<8x!tpu.dma_semaphore, #tpu.memory_space<semaphore_mem>> -> memref<1x!tpu.dma_semaphore, #tpu.memory_space<semaphore_mem>>
    %120 = tpu.memref_squeeze %119 : memref<1x!tpu.dma_semaphore, #tpu.memory_space<semaphore_mem>> -> memref<!tpu.dma_semaphore, #tpu.memory_space<semaphore_mem>>
    tpu.wait_dma2 semaphore(%120 : memref<!tpu.dma_semaphore, #tpu.memory_space<semaphore_mem>>) src(%116 : memref<128xf32, #tpu.memory_space<any>>) dst(%118 : memref<128xf32, #tpu.memory_space<vmem>>)
    return
  }
  func.func @transform_1(%arg0: i32, %arg1: memref<16xi32, #tpu.memory_space<smem>>) -> (i32, i32) {
    %c0_i32 = arith.constant 0 : i32
    %c0_i32_0 = arith.constant 0 : i32
    return %arg0, %c0_i32 : i32, i32
  }
}

</mosaic_0001>

<llo_original>
// kernel: tpu_custom_call.1
$region0: #{tpu_custom_call.1}
  #allocation0 [shape = 'u32[]', space=smem, size = 0x4, offset = 0x4, fixed_abs, tag = 'smem constant byte address 0x4 - core index']
  #allocation1 [shape = 'u32[144,128]{1,0:T(1,128)}', space=vmem, size = 0x12000, scoped, tag = 'internal scratch']
  #allocation2 [shape = 's32[8]{0}', space=sflag, size = 0x20, scoped, tag = 'scratch operand']
  #allocation3 [shape = 's32[1]{0}', space=sflag, size = 0x4, scoped, tag = 'scoped memory for tpu_custom_call.1']
  #allocation4 [shape = 'u8[512]{0}', space=smem, size = 0x200, scoped, tag = 'prefetched SMEM operand 0']
  #allocation7 [shape = 's32[]', space=sflag, size = 0x4, offset = 0, fixed_abs, tag = 'sflag constant byte address 0x0 - dummy sync flag']
  #allocation8 [shape = 's32[]', space=sflag, size = 0x4, offset = 0, fixed_abs, tag = 'sflag constant byte address 0x0 - dummy sync flag']
  #allocation9 [shape = 'u32[]', space=smem, size = 0x4, offset = 0x44, fixed_abs, tag = 'smem constant byte address 0x44 - assertion arg 0']
  #allocation10 [shape = 'u32[]', space=smem, size = 0x4, offset = 0x48, fixed_abs, tag = 'smem constant byte address 0x48 - assertion arg 1']
  #allocation11 [shape = 's32[]', space=sflag, size = 0x4, offset = 0, fixed_abs, tag = 'sflag constant byte address 0x0 - dummy sync flag']
  #allocation12 [shape = 's32[]', space=sflag, size = 0x4, offset = 0, fixed_abs, tag = 'sflag constant byte address 0x0 - dummy sync flag']
  #allocation13 [shape = 's32[]', space=sflag, size = 0x4, offset = 0, fixed_abs, tag = 'sflag constant byte address 0x0 - dummy sync flag']
  #allocation14 [shape = 's32[]', space=sflag, size = 0x4, offset = 0, fixed_abs, tag = 'sflag constant byte address 0x0 - dummy sync flag']
  #allocation15 [shape = 's32[]', space=sflag, size = 0x4, offset = 0, fixed_abs, tag = 'sflag constant byte address 0x0 - dummy sync flag']
  #allocation16 [shape = 's32[]', space=sflag, size = 0x4, offset = 0, fixed_abs, tag = 'sflag constant byte address 0x0 - dummy sync flag']
  #allocation17 [shape = 's32[]', space=sflag, size = 0x4, offset = 0, fixed_abs, tag = 'sflag constant byte address 0x0 - dummy sync flag']
  #allocation18 [shape = 's32[]', space=sflag, size = 0x4, offset = 0, fixed_abs, tag = 'sflag constant byte address 0x0 - dummy sync flag']
  #allocation19 [shape = 's32[]', space=sflag, size = 0x4, offset = 0, fixed_abs, tag = 'sflag constant byte address 0x0 - dummy sync flag']
  #allocation20 [shape = 's32[]', space=sflag, size = 0x4, offset = 0, fixed_abs, tag = 'sflag constant byte address 0x0 - dummy sync flag']
  #allocation21 [shape = 's32[]', space=sflag, size = 0x4, offset = 0, fixed_abs, tag = 'sflag constant byte address 0x0 - dummy sync flag']
  #allocation22 [shape = 's32[]', space=sflag, size = 0x4, offset = 0, fixed_abs, tag = 'sflag constant byte address 0x0 - dummy sync flag']
  #allocation23 [shape = 's32[]', space=sflag, size = 0x4, offset = 0, fixed_abs, tag = 'sflag constant byte address 0x0 - dummy sync flag']
  #allocation24 [shape = 's32[]', space=sflag, size = 0x4, offset = 0, fixed_abs, tag = 'sflag constant byte address 0x0 - dummy sync flag']
  %s0 = inlined_call_operand.hbm [shape: s32[16], index: 0, kind: input, shape index: {}]
  %s1 = inlined_call_operand.hbm [shape: f32[256,128], index: 1, kind: input, shape index: {}]
  %s2 = inlined_call_operand.hbm [shape: f32[16,128], index: 2, kind: output, shape index: {}]
  %s3 = sld [smem:[#allocation0]]
  $region57: #{tpu_custom_call.1} parent=0
    _
  %s5 = ssub.s32 1, %s3
  %s6 = scalar_select 0, %s5, %s3
  %8 = dma.hbm_to_smem %s0, 16, [#allocation4], [#allocation3]
  %9 = dma.done [#allocation3], 16
  %10 = sfence
  $region1: #{tpu_custom_call.1} parent=0
    #allocation5 [shape = 'u8[8192]{0}', space=vmem, size = 0x2000, scoped, tag = 'output window, operand 0']
    #allocation6 [shape = 's32[2]{0}', space=sflag, size = 0x8, scoped, tag = 'scoped memory for tpu_custom_call.1']
    %11 = vsyncpa [#allocation6], 0
    %s12 = scalar_lea.sflag [#allocation6], 1
    %13 = vsyncpa %s12, 0
    loop: start=0, step=1, limit=3
    $region2: #{tpu_custom_call.1} parent=1 // loop_pre_header
      _
    $region3: #{tpu_custom_call.1} parent=1 // loop_header
      %s15 = sphi 0, %s19
      %p16 = scmp.ge.s32.totalorder %s15, 3
      %s24 = sphi 0, %s26
      %s27 = sphi 0, %s24
      %s37 = sphi 0, %s27
    $region4: #{tpu_custom_call.1} parent=1 // loop_header_branch
      %18 = sbr.rel (%p16) target = $region8
    $region5: #{tpu_custom_call.1} parent=1 // loop_body
      %s20 = ssub.s32 %s15, 1
      %s21 = sadd.s32 %s15, 1
      %s22 = ssub.s32 %s15, %s21
      %p23 = scmp.eq.s32.totalorder %s22, 0
      %s25 = sadd.s32 %s24, 1
      %s26 = scalar_select %p23, %s24, %s25
      %p28 = pneg %p23
      %p29 = scmp.eq.s32.totalorder %s15, 1
      %p30 = por %p28, %p29
      %p31 = scmp.ne.s32.totalorder %s24, %s27
      %p32 = scmp.eq.s32.totalorder %s15, 0
      %p33 = por %p31, %p32
      %p34 = scmp.ne.s32.totalorder %s24, %s27
      %p35 = scmp.eq.s32.totalorder %s20, 1
      %p36 = por %p34, %p35
      %p38 = scmp.ne.s32.totalorder %s27, %s37
      %p39 = scmp.eq.s32.totalorder %s20, 0
      %p40 = por %p38, %p39
      %p41 = scmp.lt.s32.totalorder %s15, 2
      // Predicated region
      $region9: #{tpu_custom_call.1} parent=5 // pred_check
        %p42 = pneg %p41
      $region10: #{tpu_custom_call.1} parent=5 // pred_check_branch
        %44 = sbr.rel (%p42) target = $region12
      $region11: #{tpu_custom_call.1} parent=5 // pred_region
        %p45 = pneg %p33
        %p46 = pneg %p30
        %s47 = sand.u32 %s24, 1
        %s48 = scalar_lea.sflag [#allocation6], %s47
        %s49 = sand.u32 %s24, 1
        %s50 = smul.addr %s49, 8
        %s51 = scalar_lea.vmem [#allocation5], %s50
        %s52 = smul.u32 %s15, 8
        %s53 = sld [smem:[#allocation4 + %s52]]
        %s54 = smul.addr %s53, 16
        %s55 = scalar_lea.hbm %s1, %s54
        // Predicated region
        $region13: #{tpu_custom_call.1} parent=11 // pred_check
          _
        $region14: #{tpu_custom_call.1} parent=11 // pred_check_branch
          %57 = sbr.rel target = $region16
        $region15: #{tpu_custom_call.1} parent=11 // pred_region
          %58 = sst [smem:[#allocation9]] [#allocation8]
          %59 = sst [smem:[#allocation10]] [#allocation7]
        $region16: #{tpu_custom_call.1} parent=11 // pred_fallthru
          _
        %61 = shalt.err (0)
        %s63 = sshll.u32 %s51, 4
        %s64 = int_to_ptr.vmem [resolvable:$true] %s63
        %66 = dma.hbm_to_vmem [thread:$0]  %s55, 16, %s64, [#allocation2]
        %s67 = sadd.s32 %s52, 1
        %s68 = sld [smem:[#allocation4 + %s67]]
        %s69 = smul.addr %s68, 16
        %s70 = scalar_lea.hbm %s1, %s69
        %s71 = scalar_lea.vmem %s51, 1 [#allocation5]
        %s72 = scalar_lea.sflag [#allocation2], 1
        // Predicated region
        $region17: #{tpu_custom_call.1} parent=11 // pred_check
          _
        $region18: #{tpu_custom_call.1} parent=11 // pred_check_branch
          %74 = sbr.rel target = $region20
        $region19: #{tpu_custom_call.1} parent=11 // pred_region
          %75 = sst [smem:[#allocation9]] [#allocation12]
          %76 = sst [smem:[#allocation10]] [#allocation11]
        $region20: #{tpu_custom_call.1} parent=11 // pred_fallthru
          _
        %78 = shalt.err (0)
        %s80 = sshll.u32 %s71, 4
        %s81 = int_to_ptr.vmem [resolvable:$true] %s80
        %83 = dma.hbm_to_vmem [thread:$0]  %s70, 16, %s81, %s72
        %s84 = sadd.s32 %s52, 2
        %s85 = sld [smem:[#allocation4 + %s84]]
        %s86 = smul.addr %s85, 16
        %s87 = scalar_lea.hbm %s1, %s86
        %s88 = scalar_lea.vmem %s51, 2 [#allocation5]
        %s89 = scalar_lea.sflag [#allocation2], 2
        // Predicated region
        $region21: #{tpu_custom_call.1} parent=11 // pred_check
          _
        $region22: #{tpu_custom_call.1} parent=11 // pred_check_branch
          %91 = sbr.rel target = $region24
        $region23: #{tpu_custom_call.1} parent=11 // pred_region
          %92 = sst [smem:[#allocation9]] [#allocation14]
          %93 = sst [smem:[#allocation10]] [#allocation13]
        $region24: #{tpu_custom_call.1} parent=11 // pred_fallthru
          _
        %95 = shalt.err (0)
        %s97 = sshll.u32 %s88, 4
        %s98 = int_to_ptr.vmem [resolvable:$true] %s97
        %100 = dma.hbm_to_vmem [thread:$0]  %s87, 16, %s98, %s89
        %s101 = sadd.s32 %s52, 3
        %s102 = sld [smem:[#allocation4 + %s101]]
        %s103 = smul.addr %s102, 16
        %s104 = scalar_lea.hbm %s1, %s103
        %s105 = scalar_lea.vmem %s51, 3 [#allocation5]
        %s106 = scalar_lea.sflag [#allocation2], 3
        // Predicated region
        $region25: #{tpu_custom_call.1} parent=11 // pred_check
          _
        $region26: #{tpu_custom_call.1} parent=11 // pred_check_branch
          %108 = sbr.rel target = $region28
        $region27: #{tpu_custom_call.1} parent=11 // pred_region
          %109 = sst [smem:[#allocation9]] [#allocation16]
          %110 = sst [smem:[#allocation10]] [#allocation15]
        $region28: #{tpu_custom_call.1} parent=11 // pred_fallthru
          _
        %112 = shalt.err (0)
        %s114 = sshll.u32 %s105, 4
        %s115 = int_to_ptr.vmem [resolvable:$true] %s114
        %117 = dma.hbm_to_vmem [thread:$0]  %s104, 16, %s115, %s106
        %s118 = sadd.s32 %s52, 4
        %s119 = sld [smem:[#allocation4 + %s118]]
        %s120 = smul.addr %s119, 16
        %s121 = scalar_lea.hbm %s1, %s120
        %s122 = scalar_lea.vmem %s51, 4 [#allocation5]
        %s123 = scalar_lea.sflag [#allocation2], 4
        // Predicated region
        $region29: #{tpu_custom_call.1} parent=11 // pred_check
          _
        $region30: #{tpu_custom_call.1} parent=11 // pred_check_branch
          %125 = sbr.rel target = $region32
        $region31: #{tpu_custom_call.1} parent=11 // pred_region
          %126 = sst [smem:[#allocation9]] [#allocation18]
          %127 = sst [smem:[#allocation10]] [#allocation17]
        $region32: #{tpu_custom_call.1} parent=11 // pred_fallthru
          _
        %129 = shalt.err (0)
        %s131 = sshll.u32 %s122, 4
        %s132 = int_to_ptr.vmem [resolvable:$true] %s131
        %134 = dma.hbm_to_vmem [thread:$0]  %s121, 16, %s132, %s123
        %s135 = sadd.s32 %s52, 5
        %s136 = sld [smem:[#allocation4 + %s135]]
        %s137 = smul.addr %s136, 16
        %s138 = scalar_lea.hbm %s1, %s137
        %s139 = scalar_lea.vmem %s51, 5 [#allocation5]
        %s140 = scalar_lea.sflag [#allocation2], 5
        // Predicated region
        $region33: #{tpu_custom_call.1} parent=11 // pred_check
          _
        $region34: #{tpu_custom_call.1} parent=11 // pred_check_branch
          %142 = sbr.rel target = $region36
        $region35: #{tpu_custom_call.1} parent=11 // pred_region
          %143 = sst [smem:[#allocation9]] [#allocation20]
          %144 = sst [smem:[#allocation10]] [#allocation19]
        $region36: #{tpu_custom_call.1} parent=11 // pred_fallthru
          _
        %146 = shalt.err (0)
        %s148 = sshll.u32 %s139, 4
        %s149 = int_to_ptr.vmem [resolvable:$true] %s148
        %151 = dma.hbm_to_vmem [thread:$0]  %s138, 16, %s149, %s140
        %s152 = sadd.s32 %s52, 6
        %s153 = sld [smem:[#allocation4 + %s152]]
        %s154 = smul.addr %s153, 16
        %s155 = scalar_lea.hbm %s1, %s154
        %s156 = scalar_lea.vmem %s51, 6 [#allocation5]
        %s157 = scalar_lea.sflag [#allocation2], 6
        // Predicated region
        $region37: #{tpu_custom_call.1} parent=11 // pred_check
          _
        $region38: #{tpu_custom_call.1} parent=11 // pred_check_branch
          %159 = sbr.rel target = $region40
        $region39: #{tpu_custom_call.1} parent=11 // pred_region
          %160 = sst [smem:[#allocation9]] [#allocation22]
          %161 = sst [smem:[#allocation10]] [#allocation21]
        $region40: #{tpu_custom_call.1} parent=11 // pred_fallthru
          _
        %163 = shalt.err (0)
        %s165 = sshll.u32 %s156, 4
        %s166 = int_to_ptr.vmem [resolvable:$true] %s165
        %168 = dma.hbm_to_vmem [thread:$0]  %s155, 16, %s166, %s157
        %s169 = sadd.s32 %s52, 7
        %s170 = sld [smem:[#allocation4 + %s169]]
        %s171 = smul.addr %s170, 16
        %s172 = scalar_lea.hbm %s1, %s171
        %s173 = scalar_lea.vmem %s51, 7 [#allocation5]
        %s174 = scalar_lea.sflag [#allocation2], 7
        // Predicated region
        $region41: #{tpu_custom_call.1} parent=11 // pred_check
          _
        $region42: #{tpu_custom_call.1} parent=11 // pred_check_branch
          %176 = sbr.rel target = $region44
        $region43: #{tpu_custom_call.1} parent=11 // pred_region
          %177 = sst [smem:[#allocation9]] [#allocation24]
          %178 = sst [smem:[#allocation10]] [#allocation23]
        $region44: #{tpu_custom_call.1} parent=11 // pred_fallthru
          _
        %180 = shalt.err (0)
        %s182 = sshll.u32 %s173, 4
        %s183 = int_to_ptr.vmem [resolvable:$true] %s182
        %185 = dma.hbm_to_vmem [thread:$0]  %s172, 16, %s183, %s174
        %187 = dma.done [#allocation2], 16
        %189 = dma.done %s72, 16
        %191 = dma.done %s89, 16
        %193 = dma.done %s106, 16
        %195 = dma.done %s123, 16
        %197 = dma.done %s140, 16
        %199 = dma.done %s157, 16
        %201 = dma.done %s174, 16
        %s202 = sand.u32 %s24, 1
        %s203 = scalar_lea.sflag [#allocation6], %s202
        %s204 = sand.u32 %s24, 1
        %s205 = smul.addr %s204, 8
        %s206 = scalar_lea.vmem [#allocation5], %s205
        // Predicated region
        $region45: #{tpu_custom_call.1} parent=11 // pred_check
          %p207 = pneg %p30
        $region46: #{tpu_custom_call.1} parent=11 // pred_check_branch
          %209 = sbr.rel (%p207) target = $region48
        $region47: #{tpu_custom_call.1} parent=11 // pred_region
          %s211 = ssub.s32 128, 128
          %212 = vsyncadd %s203, %s211
          %s213 = smul.addr %s15, 128
          %s214 = scalar_lea.hbm %s2, %s213
          %s216 = sshll.u32 %s206, 4
          %s217 = int_to_ptr.vmem [resolvable:$true] %s216
          %219 = dma.vmem_to_hbm [thread:$0]  %s217, 128, %s214, %s203
        $region48: #{tpu_custom_call.1} parent=11 // pred_fallthru
          _
      $region12: #{tpu_custom_call.1} parent=5 // pred_fallthru
        _
      %p220 = scmp.le.s32.totalorder 1, %s15
      // Predicated region
      $region49: #{tpu_custom_call.1} parent=5 // pred_check
        %p221 = pneg %p220
      $region50: #{tpu_custom_call.1} parent=5 // pred_check_branch
        %223 = sbr.rel (%p221) target = $region52
      $region51: #{tpu_custom_call.1} parent=5 // pred_region
        %s224 = ssub.s32 %s15, 1
        // Predicated region
        $region53: #{tpu_custom_call.1} parent=51 // pred_check
          %p225 = pneg %p36
        $region54: #{tpu_custom_call.1} parent=51 // pred_check_branch
          %227 = sbr.rel (%p225) target = $region56
        $region55: #{tpu_custom_call.1} parent=51 // pred_region
          %s228 = sand.u32 %s27, 1
          %s229 = scalar_lea.sflag [#allocation6], %s228
          %s230 = sand.u32 %s27, 1
          %s231 = smul.addr %s230, 8
          %s232 = scalar_lea.vmem [#allocation5], %s231
          %233 = dma.done %s229, 128
        $region56: #{tpu_custom_call.1} parent=51 // pred_fallthru
          _
      $region52: #{tpu_custom_call.1} parent=5 // pred_fallthru
        _
    $region6: #{tpu_custom_call.1} parent=1 // loop_footer
      %s19 = sadd.s32 1, %s15
    $region7: #{tpu_custom_call.1} parent=1 // loop_footer_branch
      %14 = sbr.rel target = $region3
    $region8: #{tpu_custom_call.1} parent=1 // loop_exit
      _
    %234 = vsyncpa [#allocation6], 1
    %s235 = scalar_lea.sflag [#allocation6], 1
    %236 = vsyncpa %s235, 1
  %237 = vsyncmov [#allocation2]
  %s238 = vpop.sfrf %237
  %p239 = scmp.eq.s32.totalorder %s238, 0
  %p240 = pneg %p239
  %242 = shalt.err (%p240)
  %s243 = scalar_lea.sflag [#allocation2], 1
  %244 = vsyncmov %s243
  %s245 = vpop.sfrf %244
  %p246 = scmp.eq.s32.totalorder %s245, 0
  %p247 = pneg %p246
  %249 = shalt.err (%p247)
  %s250 = scalar_lea.sflag [#allocation2], 2
  %251 = vsyncmov %s250
  %s252 = vpop.sfrf %251
  %p253 = scmp.eq.s32.totalorder %s252, 0
  %p254 = pneg %p253
  %256 = shalt.err (%p254)
  %s257 = scalar_lea.sflag [#allocation2], 3
  %258 = vsyncmov %s257
  %s259 = vpop.sfrf %258
  %p260 = scmp.eq.s32.totalorder %s259, 0
  %p261 = pneg %p260
  %263 = shalt.err (%p261)
  %s264 = scalar_lea.sflag [#allocation2], 4
  %265 = vsyncmov %s264
  %s266 = vpop.sfrf %265
  %p267 = scmp.eq.s32.totalorder %s266, 0
  %p268 = pneg %p267
  %270 = shalt.err (%p268)
  %s271 = scalar_lea.sflag [#allocation2], 5
  %272 = vsyncmov %s271
  %s273 = vpop.sfrf %272
  %p274 = scmp.eq.s32.totalorder %s273, 0
  %p275 = pneg %p274
  %277 = shalt.err (%p275)
  %s278 = scalar_lea.sflag [#allocation2], 6
  %279 = vsyncmov %s278
  %s280 = vpop.sfrf %279
  %p281 = scmp.eq.s32.totalorder %s280, 0
  %p282 = pneg %p281
  %284 = shalt.err (%p282)
  %s285 = scalar_lea.sflag [#allocation2], 7
  %286 = vsyncmov %s285
  %s287 = vpop.sfrf %286
  %p288 = scmp.eq.s32.totalorder %s287, 0
  %p289 = pneg %p288
  %291 = shalt.err (%p289)

</llo_original>
